<compile_context>
chip_gen: v7x
topology: tpu7x:2x2x1
jax: 0.10.0
libtpu: 0.0.40
codegen_flags: <defaults>
</compile_context>

<pallas_src>
import numpy as np
import jax
import jax.numpy as jnp
from jax import lax
from jax.experimental import pallas as pl
from jax.experimental.pallas import tpu as pltpu


# ----------------------------- config (small, deterministic) ----------------
EMBED_DIMS = 32
NUM_HEADS = 4
WINDOW = (4, 4)                       # Wh, Ww
N_TOKENS = WINDOW[0] * WINDOW[1] + 1  # 17 (incl. CLS)
HEAD_DIM = EMBED_DIMS // NUM_HEADS    # 8
BATCH = 2
EXACT_SOFTMAX_RECIP = False           # True => exact divide (validation runs)


# ----------------------------- relative position index (glue, numpy) --------
def make_relative_position_index(Wh, Ww):
    coords_h = np.arange(Wh)
    coords_w = np.arange(Ww)
    hh, ww = np.meshgrid(coords_h, coords_w, indexing="ij")
    coords = np.stack([hh, ww])                      # (2, Wh, Ww)
    coords_flat = coords.reshape(2, -1)              # (2, Wh*Ww)
    rel = coords_flat[:, :, None] - coords_flat[:, None, :]  # (2, N-1, N-1)
    rel = rel.transpose(1, 2, 0).copy()              # (N-1, N-1, 2)
    rel[:, :, 0] += Wh - 1
    rel[:, :, 1] += Ww - 1
    rel[:, :, 0] *= 2 * Ww - 1
    num_rel = (2 * Wh - 1) * (2 * Ww - 1) + 3
    idx = np.zeros((Wh * Ww + 1, Wh * Ww + 1), dtype=np.int64)
    idx[1:, 1:] = rel.sum(-1)
    idx[0, :] = num_rel - 3
    idx[:, 0] = num_rel - 2
    idx[0, 0] = num_rel - 1
    return idx, num_rel


# ----------------------------- Pallas kernel --------------------------------
def beit_attn_kernel(x_ref, wqkv_ref, bqkv_ref, wproj_ref, bproj_ref,
                     relb_ref, hmask_ref, o_ref):
    B, N, C, H = BATCH, N_TOKENS, EMBED_DIMS, NUM_HEADS

    # Fused qkv projection over the whole batch (token-major, one NT matmul):
    #   (B*N, C) . (3C, C)^T -> (B*N, 3C)
    # q rows and q bias are pre-scaled; k bias is forced zero ('qv_bias').
    qkv = lax.dot_general(x_ref[...], wqkv_ref[...], (((1,), (1,)), ((), ())),
                          preferred_element_type=jnp.float32)
    qkv = qkv + bqkv_ref[...]                        # one (1, 3C) bias-row add

    hmask = hmask_ref[...]                           # (H*N, C) per-head lane mask
    relb = relb_ref[...]                             # (H*N, N) rel-pos bias

    ctx_parts = []
    for b in range(B):                               # static unroll over windows
        q_b = qkv[b * N:(b + 1) * N, 0:C]            # (N, C)   (pre-scaled)
        k_b = qkv[b * N:(b + 1) * N, C:2 * C]        # (N, C)
        v_b = qkv[b * N:(b + 1) * N, 2 * C:3 * C]    # (N, C)

        # Stack the H heads along sublanes; mask each row-block to its own
        # hd-wide lane range so ALL heads' scores come from one NT matmul:
        #   q_stack[h*N + i, c] = q_b[i, c] * [c in head h]
        q_stack = jnp.concatenate([q_b] * H, axis=0) * hmask        # (H*N, C)

        # scores for all heads: (H*N, C) . (N, C)^T -> (H*N, N)     (NT)
        s = lax.dot_general(q_stack, k_b, (((1,), (1,)), ((), ())),
                            preferred_element_type=jnp.float32)
        s = s + relb                                                 # one add

        # one softmax over keys for all (head, query) rows
        m = jnp.max(s, axis=-1, keepdims=True)
        e = jnp.exp(s - m)
        denom = jnp.sum(e, axis=-1, keepdims=True)
        if EXACT_SOFTMAX_RECIP:
            p = e / denom
        else:
            p = e * pl.reciprocal(denom, approx=True)  # EUP vrcp (free slot)

        # PV for all heads: (H*N, N) . (N, C) -> (H*N, C)           (NN)
        t = lax.dot_general(p, v_b, (((1,), (0,)), ((), ())),
                            preferred_element_type=jnp.float32) * hmask
        # fold head-stacked rows back to (N, C): ctx[i, c] = t[head(c)*N + i, c]
        ctx_b = t[0:N, :]
        for h in range(1, H):
            ctx_b = ctx_b + t[h * N:(h + 1) * N, :]
        ctx_parts.append(ctx_b)                                      # (N, C)

    ctx = jnp.concatenate(ctx_parts, axis=0)                         # (B*N, C)
    # output projection fused over the whole batch:
    #   (B*N, C) . (C_out, C_in)^T -> (B*N, C)                       (NT)
    out = lax.dot_general(ctx, wproj_ref[...], (((1,), (1,)), ((), ())),
                          preferred_element_type=jnp.float32)
    out = out + bproj_ref[...]                                       # (1, C) bias
    o_ref[...] = out.astype(o_ref.dtype)             # single full-block store
    # TODO(synk): attn_drop / proj_drop are rate 0.0 in this config, so no
    # dropout masking is performed inside the kernel.
    # TODO(synk): for production BEiT shapes (C=768, many windows) tile the
    # token axis over a "parallel" grid (>=256 tokens per block for the v6e
    # MXU, >=2 blocks in flight for v7x's two TensorCores), feed bf16
    # activations/weights with f32 accumulation, and replace the head-stacked
    # masking trick with per-head-block dots so the lane axis stays 128-dense.


# ----------------------------- wrapper ---------------------------------------
@jax.jit
def beit_attention(x, w_qkv, q_bias, v_bias, w_proj, b_proj, rel_bias):
    B, N, C = x.shape
    H = rel_bias.shape[0]
    hd = C // H
    scale = hd ** (-0.5)
    f32 = jnp.float32

    # ---- wrapper-side layout/constant plumbing (done once under jit) -------
    row_scale = jnp.concatenate(
        [jnp.full((C,), scale, f32), jnp.ones((2 * C,), f32)])[:, None]
    wqkv = w_qkv.astype(f32) * row_scale                     # (3C, C), q pre-scaled
    bqkv = jnp.concatenate(
        [q_bias.astype(f32) * scale, jnp.zeros((C,), f32),
         v_bias.astype(f32)])[None, :]                       # (1, 3C) bias row
    wproj = w_proj.astype(f32)                               # (C_out, C_in) native
    bproj = b_proj.astype(f32)[None, :]                      # (1, C)

    x2d = x.astype(f32).reshape(B * N, C)                    # whole-batch token slab
    relb = rel_bias.astype(f32).reshape(H * N, N)            # head-stacked bias
    # per-head lane mask: row block h selects lanes [h*hd, (h+1)*hd)
    hmask = (jnp.repeat(jnp.arange(H), N)[:, None]
             == (jnp.arange(C) // hd)[None, :]).astype(f32)  # (H*N, C)

    out2d = pl.pallas_call(
        beit_attn_kernel,
        out_shape=jax.ShapeDtypeStruct((B * N, C), f32),
        grid_spec=pltpu.PrefetchScalarGridSpec(
            num_scalar_prefetch=0,
            grid=(1,),        # whole batch in one step; everything fits in VMEM
            in_specs=[
                pl.BlockSpec((B * N, C), lambda i: (0, 0)),      # x tokens
                pl.BlockSpec((3 * C, C), lambda i: (0, 0)),      # W_qkv (q pre-scaled)
                pl.BlockSpec((1, 3 * C), lambda i: (0, 0)),      # qkv bias row
                pl.BlockSpec((C, C), lambda i: (0, 0)),          # W_proj (native)
                pl.BlockSpec((1, C), lambda i: (0, 0)),          # proj bias row
                pl.BlockSpec((H * N, N), lambda i: (0, 0)),      # rel-pos bias
                pl.BlockSpec((H * N, C), lambda i: (0, 0)),      # head lane mask
            ],
            out_specs=pl.BlockSpec((B * N, C), lambda i: (0, 0)),
        ),
        compiler_params=pltpu.CompilerParams(
            dimension_semantics=("arbitrary",)),
    )(x2d, wqkv, bqkv, wproj, bproj, relb, hmask)

    return out2d.reshape(B, N, C).astype(x.dtype)


# ----------------------------- pure-JAX reference ---------------------------
def beit_attention_ref(x, w_qkv, q_bias, v_bias, w_proj, b_proj, rel_bias):
    B, N, C = x.shape
    H = rel_bias.shape[0]
    hd = C // H
    scale = hd ** (-0.5)
    qkv_bias = jnp.concatenate([q_bias, jnp.zeros_like(q_bias), v_bias])
    qkv = jnp.einsum("bnc,oc->bno", x, w_qkv) + qkv_bias
    qkv = qkv.reshape(B, N, 3, H, hd).transpose(2, 0, 3, 1, 4)
    q, k, v = qkv[0] * scale, qkv[1], qkv[2]
    attn = jnp.einsum("bhqd,bhkd->bhqk", q, k) + rel_bias[None]
    attn = jax.nn.softmax(attn, axis=-1)
    out = jnp.einsum("bhqk,bhkd->bhqd", attn, v)
    out = out.transpose(0, 2, 1, 3).reshape(B, N, C)
    return jnp.einsum("bnc,oc->bno", out, w_proj) + b_proj


# ----------------------------- main ------------------------------------------
if __name__ == "__main__":
    key = jax.random.PRNGKey(0)
    ks = jax.random.split(key, 8)

    C, H = EMBED_DIMS, NUM_HEADS
    Wh, Ww = WINDOW
    N = N_TOKENS

    # deterministic synthetic parameters (shapes per module __init__)
    w_qkv = jax.random.normal(ks[0], (3 * C, C), jnp.float32) * 0.02
    q_bias = jax.random.normal(ks[1], (C,), jnp.float32) * 0.02
    v_bias = jax.random.normal(ks[2], (C,), jnp.float32) * 0.02
    w_proj = jax.random.normal(ks[3], (C, C), jnp.float32) * 0.02
    b_proj = jax.random.normal(ks[4], (C,), jnp.float32) * 0.02

    num_rel_idx, num_rel = make_relative_position_index(Wh, Ww)
    rel_table = jax.random.normal(ks[5], (num_rel, H), jnp.float32) * 0.02
    # gather table -> (N, N, H) -> (H, N, N)   (glue, plain JAX)
    rel_bias = rel_table[jnp.asarray(num_rel_idx.reshape(-1))]
    rel_bias = rel_bias.reshape(N, N, H).transpose(2, 0, 1)

    x = jax.random.normal(ks[6], (BATCH, N, C), jnp.float32)

    out = beit_attention(x, w_qkv, q_bias, v_bias, w_proj, b_proj, rel_bias)
    out = jax.block_until_ready(out)

    ref = beit_attention_ref(x, w_qkv, q_bias, v_bias, w_proj, b_proj, rel_bias)
    assert out.shape == (BATCH, N, C)
    assert jnp.allclose(out, ref, atol=1e-4, rtol=1e-4), "mismatch vs reference"

    print("KERNEL_OK")
</pallas_src>

<mosaic_0001>
module attributes {stable_mosaic.version = 11 : i64} {
  func.func @beit_attn_kernel(%arg0: i32, %arg1: memref<34x32xf32, #tpu.memory_space<vmem>>, %arg2: memref<96x32xf32, #tpu.memory_space<vmem>>, %arg3: memref<1x96xf32, #tpu.memory_space<vmem>>, %arg4: memref<32x32xf32, #tpu.memory_space<vmem>>, %arg5: memref<1x32xf32, #tpu.memory_space<vmem>>, %arg6: memref<68x17xf32, #tpu.memory_space<vmem>>, %arg7: memref<68x32xf32, #tpu.memory_space<vmem>>, %arg8: memref<34x32xf32, #tpu.memory_space<vmem>>) attributes {dimension_semantics = [#tpu.dimension_semantics<arbitrary>], iteration_bounds = array<i64: 1>, scalar_prefetch = 0 : i64, scratch_operands = 0 : i64, tpu.core_type = #tpu.core_type<tc>, window_params = [{pipeline_mode = #tpu.pipeline_mode<synchronous>, transform_indices = @transform_0, window_bounds = array<i64: 34, 32>}, {pipeline_mode = #tpu.pipeline_mode<synchronous>, transform_indices = @transform_1, window_bounds = array<i64: 96, 32>}, {pipeline_mode = #tpu.pipeline_mode<synchronous>, transform_indices = @transform_2, window_bounds = array<i64: 1, 96>}, {pipeline_mode = #tpu.pipeline_mode<synchronous>, transform_indices = @transform_3, window_bounds = array<i64: 32, 32>}, {pipeline_mode = #tpu.pipeline_mode<synchronous>, transform_indices = @transform_4, window_bounds = array<i64: 1, 32>}, {pipeline_mode = #tpu.pipeline_mode<synchronous>, transform_indices = @transform_5, window_bounds = array<i64: 68, 17>}, {pipeline_mode = #tpu.pipeline_mode<synchronous>, transform_indices = @transform_6, window_bounds = array<i64: 68, 32>}, {pipeline_mode = #tpu.pipeline_mode<synchronous>, transform_indices = @transform_7, window_bounds = array<i64: 34, 32>}]} {
    %c0 = arith.constant 0 : index
    %c0_0 = arith.constant 0 : index
    %0 = vector.load %arg1[%c0, %c0_0] : memref<34x32xf32, #tpu.memory_space<vmem>>, vector<34x32xf32>
    %c0_1 = arith.constant 0 : index
    %c0_2 = arith.constant 0 : index
    %1 = vector.load %arg2[%c0_1, %c0_2] : memref<96x32xf32, #tpu.memory_space<vmem>>, vector<96x32xf32>
    %cst = arith.constant dense<0.000000e+00> : vector<34x96xf32>
    %2 = tpu.matmul %0, %1, %cst {dimension_numbers = #tpu.dot_dimension_numbers<[1], [1], [0], [0], [0, 0, 1, 0], [], []>} : vector<34x32xf32>, vector<96x32xf32>, vector<34x96xf32> -> vector<34x96xf32>
    %c0_3 = arith.constant 0 : index
    %c0_4 = arith.constant 0 : index
    %3 = vector.load %arg3[%c0_3, %c0_4] : memref<1x96xf32, #tpu.memory_space<vmem>>, vector<1x96xf32>
    %4 = vector.broadcast %3 : vector<1x96xf32> to vector<34x96xf32>
    %5 = arith.addf %2, %4 : vector<34x96xf32>
    %c0_5 = arith.constant 0 : index
    %c0_6 = arith.constant 0 : index
    %6 = vector.load %arg7[%c0_5, %c0_6] : memref<68x32xf32, #tpu.memory_space<vmem>>, vector<68x32xf32>
    %c0_7 = arith.constant 0 : index
    %c0_8 = arith.constant 0 : index
    %7 = vector.load %arg6[%c0_7, %c0_8] : memref<68x17xf32, #tpu.memory_space<vmem>>, vector<68x17xf32>
    %8 = vector.extract_strided_slice %5 {offsets = [0, 0], sizes = [17, 32], strides = [1, 1]} : vector<34x96xf32> to vector<17x32xf32>
    %9 = vector.extract_strided_slice %5 {offsets = [0, 32], sizes = [17, 32], strides = [1, 1]} : vector<34x96xf32> to vector<17x32xf32>
    %10 = vector.extract_strided_slice %5 {offsets = [0, 64], sizes = [17, 32], strides = [1, 1]} : vector<34x96xf32> to vector<17x32xf32>
    %11 = tpu.concatenate %8, %8, %8, %8 in 0 : vector<17x32xf32>, vector<17x32xf32>, vector<17x32xf32>, vector<17x32xf32> -> vector<68x32xf32>
    %12 = arith.mulf %11, %6 : vector<68x32xf32>
    %cst_9 = arith.constant dense<0.000000e+00> : vector<68x17xf32>
    %13 = tpu.matmul %12, %9, %cst_9 {dimension_numbers = #tpu.dot_dimension_numbers<[1], [1], [0], [0], [0, 0, 1, 0], [], []>} : vector<68x32xf32>, vector<17x32xf32>, vector<68x17xf32> -> vector<68x17xf32>
    %14 = arith.addf %13, %7 : vector<68x17xf32>
    %cst_10 = arith.constant dense<0xFF800000> : vector<68xf32>
    %15 = vector.multi_reduction <maximumf>, %14, %cst_10 [1] : vector<68x17xf32> to vector<68xf32>
    %16 = vector.shape_cast %15 : vector<68xf32> to vector<68x1xf32>
    %17 = vector.broadcast %16 : vector<68x1xf32> to vector<68x17xf32>
    %18 = arith.subf %14, %17 : vector<68x17xf32>
    %19 = math.exp %18 : vector<68x17xf32>
    %cst_11 = arith.constant dense<0.000000e+00> : vector<68xf32>
    %20 = vector.multi_reduction <add>, %19, %cst_11 [1] : vector<68x17xf32> to vector<68xf32>
    %21 = vector.shape_cast %20 : vector<68xf32> to vector<68x1xf32>
    %22 = tpu.reciprocal %21 {approx = true} : vector<68x1xf32> -> vector<68x1xf32>
    %23 = vector.broadcast %22 : vector<68x1xf32> to vector<68x17xf32>
    %24 = arith.mulf %19, %23 : vector<68x17xf32>
    %cst_12 = arith.constant dense<0.000000e+00> : vector<68x32xf32>
    %25 = tpu.matmul %24, %10, %cst_12 {dimension_numbers = #tpu.dot_dimension_numbers<[1], [0], [0], [1], [0, 0, 1, 1], [], []>} : vector<68x17xf32>, vector<17x32xf32>, vector<68x32xf32> -> vector<68x32xf32>
    %26 = arith.mulf %25, %6 : vector<68x32xf32>
    %27 = vector.extract_strided_slice %26 {offsets = [0, 0], sizes = [17, 32], strides = [1, 1]} : vector<68x32xf32> to vector<17x32xf32>
    %28 = vector.extract_strided_slice %26 {offsets = [17, 0], sizes = [17, 32], strides = [1, 1]} : vector<68x32xf32> to vector<17x32xf32>
    %29 = arith.addf %27, %28 : vector<17x32xf32>
    %30 = vector.extract_strided_slice %26 {offsets = [34, 0], sizes = [17, 32], strides = [1, 1]} : vector<68x32xf32> to vector<17x32xf32>
    %31 = arith.addf %29, %30 : vector<17x32xf32>
    %32 = vector.extract_strided_slice %26 {offsets = [51, 0], sizes = [17, 32], strides = [1, 1]} : vector<68x32xf32> to vector<17x32xf32>
    %33 = arith.addf %31, %32 : vector<17x32xf32>
    %34 = vector.extract_strided_slice %5 {offsets = [17, 0], sizes = [17, 32], strides = [1, 1]} : vector<34x96xf32> to vector<17x32xf32>
    %35 = vector.extract_strided_slice %5 {offsets = [17, 32], sizes = [17, 32], strides = [1, 1]} : vector<34x96xf32> to vector<17x32xf32>
    %36 = vector.extract_strided_slice %5 {offsets = [17, 64], sizes = [17, 32], strides = [1, 1]} : vector<34x96xf32> to vector<17x32xf32>
    %37 = tpu.concatenate %34, %34, %34, %34 in 0 : vector<17x32xf32>, vector<17x32xf32>, vector<17x32xf32>, vector<17x32xf32> -> vector<68x32xf32>
    %38 = arith.mulf %37, %6 : vector<68x32xf32>
    %cst_13 = arith.constant dense<0.000000e+00> : vector<68x17xf32>
    %39 = tpu.matmul %38, %35, %cst_13 {dimension_numbers = #tpu.dot_dimension_numbers<[1], [1], [0], [0], [0, 0, 1, 0], [], []>} : vector<68x32xf32>, vector<17x32xf32>, vector<68x17xf32> -> vector<68x17xf32>
    %40 = arith.addf %39, %7 : vector<68x17xf32>
    %cst_14 = arith.constant dense<0xFF800000> : vector<68xf32>
    %41 = vector.multi_reduction <maximumf>, %40, %cst_14 [1] : vector<68x17xf32> to vector<68xf32>
    %42 = vector.shape_cast %41 : vector<68xf32> to vector<68x1xf32>
    %43 = vector.broadcast %42 : vector<68x1xf32> to vector<68x17xf32>
    %44 = arith.subf %40, %43 : vector<68x17xf32>
    %45 = math.exp %44 : vector<68x17xf32>
    %cst_15 = arith.constant dense<0.000000e+00> : vector<68xf32>
    %46 = vector.multi_reduction <add>, %45, %cst_15 [1] : vector<68x17xf32> to vector<68xf32>
    %47 = vector.shape_cast %46 : vector<68xf32> to vector<68x1xf32>
    %48 = tpu.reciprocal %47 {approx = true} : vector<68x1xf32> -> vector<68x1xf32>
    %49 = vector.broadcast %48 : vector<68x1xf32> to vector<68x17xf32>
    %50 = arith.mulf %45, %49 : vector<68x17xf32>
    %cst_16 = arith.constant dense<0.000000e+00> : vector<68x32xf32>
    %51 = tpu.matmul %50, %36, %cst_16 {dimension_numbers = #tpu.dot_dimension_numbers<[1], [0], [0], [1], [0, 0, 1, 1], [], []>} : vector<68x17xf32>, vector<17x32xf32>, vector<68x32xf32> -> vector<68x32xf32>
    %52 = arith.mulf %51, %6 : vector<68x32xf32>
    %53 = vector.extract_strided_slice %52 {offsets = [0, 0], sizes = [17, 32], strides = [1, 1]} : vector<68x32xf32> to vector<17x32xf32>
    %54 = vector.extract_strided_slice %52 {offsets = [17, 0], sizes = [17, 32], strides = [1, 1]} : vector<68x32xf32> to vector<17x32xf32>
    %55 = arith.addf %53, %54 : vector<17x32xf32>
    %56 = vector.extract_strided_slice %52 {offsets = [34, 0], sizes = [17, 32], strides = [1, 1]} : vector<68x32xf32> to vector<17x32xf32>
    %57 = arith.addf %55, %56 : vector<17x32xf32>
    %58 = vector.extract_strided_slice %52 {offsets = [51, 0], sizes = [17, 32], strides = [1, 1]} : vector<68x32xf32> to vector<17x32xf32>
    %59 = arith.addf %57, %58 : vector<17x32xf32>
    %60 = tpu.concatenate %33, %59 in 0 : vector<17x32xf32>, vector<17x32xf32> -> vector<34x32xf32>
    %c0_17 = arith.constant 0 : index
    %c0_18 = arith.constant 0 : index
    %61 = vector.load %arg4[%c0_17, %c0_18] : memref<32x32xf32, #tpu.memory_space<vmem>>, vector<32x32xf32>
    %cst_19 = arith.constant dense<0.000000e+00> : vector<34x32xf32>
    %62 = tpu.matmul %60, %61, %cst_19 {dimension_numbers = #tpu.dot_dimension_numbers<[1], [1], [0], [0], [0, 0, 1, 0], [], []>} : vector<34x32xf32>, vector<32x32xf32>, vector<34x32xf32> -> vector<34x32xf32>
    %c0_20 = arith.constant 0 : index
    %c0_21 = arith.constant 0 : index
    %63 = vector.load %arg5[%c0_20, %c0_21] : memref<1x32xf32, #tpu.memory_space<vmem>>, vector<1x32xf32>
    %64 = vector.broadcast %63 : vector<1x32xf32> to vector<34x32xf32>
    %65 = arith.addf %62, %64 : vector<34x32xf32>
    %c0_22 = arith.constant 0 : index
    %c0_23 = arith.constant 0 : index
    %66 = vector.load %arg8[%c0_22, %c0_23] : memref<34x32xf32, #tpu.memory_space<vmem>>, vector<34x32xf32>
    tpu.vector_store %arg8[%c0_22, %c0_23], %65 {strides = array<i32>} : memref<34x32xf32, #tpu.memory_space<vmem>>, vector<34x32xf32>,
    return
  }
  func.func @transform_0(%arg0: i32) -> (i32, i32) {
    %c0_i32 = arith.constant 0 : i32
    %c0_i32_0 = arith.constant 0 : i32
    %c0_i32_1 = arith.constant 0 : i32
    return %c0_i32, %c0_i32_0 : i32, i32
  }
  func.func @transform_1(%arg0: i32) -> (i32, i32) {
    %c0_i32 = arith.constant 0 : i32
    %c0_i32_0 = arith.constant 0 : i32
    %c0_i32_1 = arith.constant 0 : i32
    return %c0_i32, %c0_i32_0 : i32, i32
  }
  func.func @transform_2(%arg0: i32) -> (i32, i32) {
    %c0_i32 = arith.constant 0 : i32
    %c0_i32_0 = arith.constant 0 : i32
    %c0_i32_1 = arith.constant 0 : i32
    return %c0_i32, %c0_i32_0 : i32, i32
  }
  func.func @transform_3(%arg0: i32) -> (i32, i32) {
    %c0_i32 = arith.constant 0 : i32
    %c0_i32_0 = arith.constant 0 : i32
    %c0_i32_1 = arith.constant 0 : i32
    return %c0_i32, %c0_i32_0 : i32, i32
  }
  func.func @transform_4(%arg0: i32) -> (i32, i32) {
    %c0_i32 = arith.constant 0 : i32
    %c0_i32_0 = arith.constant 0 : i32
    %c0_i32_1 = arith.constant 0 : i32
    return %c0_i32, %c0_i32_0 : i32, i32
  }
  func.func @transform_5(%arg0: i32) -> (i32, i32) {
    %c0_i32 = arith.constant 0 : i32
    %c0_i32_0 = arith.constant 0 : i32
    %c0_i32_1 = arith.constant 0 : i32
    return %c0_i32, %c0_i32_0 : i32, i32
  }
  func.func @transform_6(%arg0: i32) -> (i32, i32) {
    %c0_i32 = arith.constant 0 : i32
    %c0_i32_0 = arith.constant 0 : i32
    %c0_i32_1 = arith.constant 0 : i32
    return %c0_i32, %c0_i32_0 : i32, i32
  }
  func.func @transform_7(%arg0: i32) -> (i32, i32) {
    %c0_i32 = arith.constant 0 : i32
    %c0_i32_0 = arith.constant 0 : i32
    %c0_i32_1 = arith.constant 0 : i32
    return %c0_i32, %c0_i32_0 : i32, i32
  }
}

</mosaic_0001>

<llo_original>
// kernel: eq.8
$region0: #{eq.8}
  %s0 = inlined_call_operand.vmem [shape: s32[4,17], index: 0, kind: input, shape index: {}]
  %s1 = inlined_call_operand.vmem [shape: s32[68], index: 1, kind: output, shape index: {}]
  $region1: #{eq.8} parent=0
    #allocation0 [shape = 'u8[4096]{0}', space=vmem, size = 0x1000, scoped, tag = 'scoped mem for output reshape']
    #allocation1 [shape = 'u8[4096]{0}', space=vmem, size = 0x1000, scoped, tag = 'scoped mem for input reshape']
    %s3 = sshllo.u32 0, 4
    %v4 = vld [vmem:[%s0] sm:%s3]
    %5 = vst [vmem:[#allocation1] sm:%s3] %v4
    %v6 = vld [vmem:[#allocation1] sm:$0x1]
    %vm7 = vcmask 138240
    %8 = vst.msk [vmem:[#allocation0] sm:$0x1] %vm7, %v6
    %s9 = scalar_lea.vmem [#allocation1], 3
    %v10 = vld [vmem:[%s9] sm:$0x1]
    %11 = vrot.lane.b32.xlu0 %v10, 51
    %v12 = vpop.permute.xlu0 %11
    %vm13 = vcmask 556440
    %14 = vst.msk [vmem:[#allocation0] sm:$0x1] %vm13, %v12
    %s15 = scalar_lea.vmem [#allocation1], 2
    %v16 = vld [vmem:[%s15] sm:$0x1]
    %17 = vrot.lane.b32.xlu0 %v16, 34
    %v18 = vpop.permute.xlu0 %17
    %vm19 = vcmask 417040
    %20 = vst.msk [vmem:[#allocation0] sm:$0x1] %vm19, %v18
    %s21 = scalar_lea.vmem [#allocation1], 1
    %v22 = vld [vmem:[%s21] sm:$0x1]
    %23 = vrot.lane.b32.xlu0 %v22, 17
    %v24 = vpop.permute.xlu0 %23
    %vm25 = vcmask 277640
    %26 = vst.msk [vmem:[#allocation0] sm:$0x1] %vm25, %v24
    %s28 = sshllo.u32 0, 1
    %v30 = vld [vmem:[#allocation0] sm:%s28]
    %s31 = sshllo.u32 0, 1
    %32 = vst [vmem:[%s1] sm:%s31] %v30

// kernel: beit_attention.1
$region0: #{beit_attention.1}
  #allocation0 [shape = 'u32[]', space=smem, size = 0x4, offset = 0x4, fixed_abs, tag = 'smem constant byte address 0x4 - core index']
  #allocation1 [shape = 'u32[144,128]{1,0:T(1,128)}', space=vmem, size = 0x12000, scoped, tag = 'internal scratch']
  %s0 = inlined_call_operand.vmem [shape: f32[34,32], index: 0, kind: input, shape index: {}]
  %s1 = inlined_call_operand.vmem [shape: f32[96,32], index: 1, kind: input, shape index: {}]
  %s2 = inlined_call_operand.vmem [shape: f32[1,96], index: 2, kind: input, shape index: {}]
  %s3 = inlined_call_operand.vmem [shape: f32[32,32], index: 3, kind: input, shape index: {}]
  %s4 = inlined_call_operand.vmem [shape: f32[1,32], index: 4, kind: input, shape index: {}]
  %s5 = inlined_call_operand.vmem [shape: f32[68,17], index: 5, kind: input, shape index: {}]
  %s6 = inlined_call_operand.vmem [shape: f32[68,32], index: 6, kind: input, shape index: {}]
  %s7 = inlined_call_operand.vmem [shape: f32[34,32], index: 7, kind: output, shape index: {}]
  %s8 = sld [smem:[#allocation0]]
  $region38: #{beit_attention.1} parent=0
    _
  %s10 = ssub.s32 1, %s8
  %s11 = scalar_select 0, %s10, %s8
  // Predicated region
  $region2: #{beit_attention.1} parent=0 // pred_check
    _
  $region3: #{beit_attention.1} parent=0 // pred_check_branch
    %13 = sbr.rel (0) target = $region5
  $region4: #{beit_attention.1} parent=0 // pred_region
    _
  $region5: #{beit_attention.1} parent=0 // pred_fallthru
    _
  // Predicated region
  $region6: #{beit_attention.1} parent=0 // pred_check
    _
  $region7: #{beit_attention.1} parent=0 // pred_check_branch
    %15 = sbr.rel (0) target = $region9
  $region8: #{beit_attention.1} parent=0 // pred_region
    _
  $region9: #{beit_attention.1} parent=0 // pred_fallthru
    _
  // Predicated region
  $region10: #{beit_attention.1} parent=0 // pred_check
    _
  $region11: #{beit_attention.1} parent=0 // pred_check_branch
    %17 = sbr.rel (0) target = $region13
  $region12: #{beit_attention.1} parent=0 // pred_region
    _
  $region13: #{beit_attention.1} parent=0 // pred_fallthru
    _
  // Predicated region
  $region14: #{beit_attention.1} parent=0 // pred_check
    _
  $region15: #{beit_attention.1} parent=0 // pred_check_branch
    %19 = sbr.rel (0) target = $region17
  $region16: #{beit_attention.1} parent=0 // pred_region
    _
  $region17: #{beit_attention.1} parent=0 // pred_fallthru
    _
  // Predicated region
  $region18: #{beit_attention.1} parent=0 // pred_check
    _
  $region19: #{beit_attention.1} parent=0 // pred_check_branch
    %21 = sbr.rel (0) target = $region21
  $region20: #{beit_attention.1} parent=0 // pred_region
    _
  $region21: #{beit_attention.1} parent=0 // pred_fallthru
    _
  // Predicated region
  $region22: #{beit_attention.1} parent=0 // pred_check
    _
  $region23: #{beit_attention.1} parent=0 // pred_check_branch
    %23 = sbr.rel (0) target = $region25
  $region24: #{beit_attention.1} parent=0 // pred_region
    _
  $region25: #{beit_attention.1} parent=0 // pred_fallthru
    _
  // Predicated region
  $region26: #{beit_attention.1} parent=0 // pred_check
    _
  $region27: #{beit_attention.1} parent=0 // pred_check_branch
    %25 = sbr.rel (0) target = $region29
  $region28: #{beit_attention.1} parent=0 // pred_region
    _
  $region29: #{beit_attention.1} parent=0 // pred_fallthru
    _
  %v26 = vld [vmem:[%s0] sm:$0xff]
  %v27 = vld [vmem:[%s0 + $0x8] sm:$0xff]
  %v28 = vld [vmem:[%s0 + $0x10] sm:$0xff]
  %v29 = vld [vmem:[%s0 + $0x18] sm:$0xff]
  %v30 = vld [vmem:[%s0 + $0x20] sm:$0x3]
  %v31 = vld [vmem:[%s1] sm:$0xff]
  %v32 = vld [vmem:[%s1 + $0x8] sm:$0xff]
  %v33 = vld [vmem:[%s1 + $0x10] sm:$0xff]
  %v34 = vld [vmem:[%s1 + $0x18] sm:$0xff]
  %v35 = vld [vmem:[%s1 + $0x20] sm:$0xff]
  %v36 = vld [vmem:[%s1 + $0x28] sm:$0xff]
  %v37 = vld [vmem:[%s1 + $0x30] sm:$0xff]
  %v38 = vld [vmem:[%s1 + $0x38] sm:$0xff]
  %v39 = vld [vmem:[%s1 + $0x40] sm:$0xff]
  %v40 = vld [vmem:[%s1 + $0x48] sm:$0xff]
  %v41 = vld [vmem:[%s1 + $0x50] sm:$0xff]
  %v42 = vld [vmem:[%s1 + $0x58] sm:$0xff]
  %v43 = vld [vmem:[%s2] sm:$0x1]
  %v45 = vlaneseq
  %v46 = vshrl.u32 %v45, 7
  %v47 = vsub.s32 0, %v46
  %v48 = vrot.slane %v43, %v47
  %vm50 = vcmask 261120
  %v52 = vsel %vm50, %v26, 0
  %v55 = vsel %vm50, %v27, 0
  %v58 = vsel %vm50, %v28, 0
  %v61 = vsel %vm50, %v29, 0
  %v64 = vsel %vm50, %v30, 0
  %v67 = vsel %vm50, %v31, 0
  %v70 = vsel %vm50, %v32, 0
  %v73 = vsel %vm50, %v33, 0
  %v76 = vsel %vm50, %v34, 0
  %v79 = vsel %vm50, %v35, 0
  %v82 = vsel %vm50, %v36, 0
  %v85 = vsel %vm50, %v37, 0
  %v88 = vsel %vm50, %v38, 0
  %v91 = vsel %vm50, %v39, 0
  %v94 = vsel %vm50, %v40, 0
  %v97 = vsel %vm50, %v41, 0
  %v100 = vsel %vm50, %v42, 0
  %102 = vmatprep.subr.mxu0 0.0
  %103 = vmatpush1.xpose.msra.mxu0 %v67
  %104 = vmatprep.subr.mxu0 0.0
  %105 = vmatpush1.xpose.msra.mxu0 %v70
  %106 = vmatprep.subr.mxu0 0.0
  %107 = vmatpush1.xpose.msra.mxu0 %v73
  %108 = vmatprep.subr.mxu0 0.0
  %109 = vmatpush1.xpose.msra.mxu0 %v76
  %110 = vmatprep.subr.mxu0 0.0
  %111 = vmatpush1.xpose.msra.mxu0 %v79
  %112 = vmatprep.subr.mxu0 0.0
  %113 = vmatpush1.xpose.msra.mxu0 %v82
  %114 = vmatprep.subr.mxu0 0.0
  %115 = vmatpush1.xpose.msra.mxu0 %v85
  %116 = vmatprep.subr.mxu0 0.0
  %117 = vmatpush1.xpose.msra.mxu0 %v88
  %118 = vmatprep.subr.mxu0 0.0
  %119 = vmatpush1.xpose.msra.mxu0 %v91
  %120 = vmatprep.subr.mxu0 0.0
  %121 = vmatpush1.xpose.msra.mxu0 %v94
  %122 = vmatprep.subr.mxu0 0.0
  %123 = vmatpush1.xpose.msra.mxu0 %v97
  %124 = vmatprep.subr.mxu0 0.0
  %125 = vmatpush1.xpose.msra.mxu0 %v100
  %126 = vmatprep.subr.mxu0 0.0
  %127 = vmatpush1.xpose.msra.mxu0 0.0
  %128 = vmatprep.subr.mxu0 0.0
  %129 = vmatpush1.xpose.msra.mxu0 0.0
  %130 = vmatprep.subr.mxu0 0.0
  %131 = vmatpush1.xpose.msra.mxu0 0.0
  %132 = vmatprep.subr.mxu0 0.0
  %133 = vmatpush1.xpose.msra.mxu0 0.0
  %134 = vmatprep.subr.mxu0 0.0
  %135 = vmatpush1.xpose.msra.mxu0 0.0
  %136 = vmatprep.subr.mxu0 0.0
  %137 = vmatpush1.xpose.msra.mxu0 0.0
  %138 = vmatprep.subr.mxu0 0.0
  %139 = vmatpush1.xpose.msra.mxu0 0.0
  %140 = vmatprep.subr.mxu0 0.0
  %141 = vmatpush1.xpose.msra.mxu0 0.0
  %142 = vmatprep.subr.mxu0 0.0
  %143 = vmatpush1.xpose.msra.mxu0 0.0
  %144 = vmatprep.subr.mxu0 0.0
  %145 = vmatpush1.xpose.msra.mxu0 0.0
  %146 = vmatprep.subr.mxu0 0.0
  %147 = vmatpush1.xpose.msra.mxu0 0.0
  %148 = vmatprep.subr.mxu0 0.0
  %149 = vmatpush1.xpose.msra.mxu0 0.0
  %150 = vmatprep.subr.mxu0 0.0
  %151 = vmatpush1.xpose.msra.mxu0 0.0
  %152 = vmatprep.subr.mxu0 0.0
  %153 = vmatpush1.xpose.msra.mxu0 0.0
  %154 = vmatprep.subr.mxu0 0.0
  %155 = vmatpush1.xpose.msra.mxu0 0.0
  %156 = vmatprep.subr.mxu0 0.0
  %157 = vmatpush1.xpose.msra.mxu0 0.0
  %158 = vmatprep.subr.mxu0 0.0
  %159 = vmatpush1.xpose.msra.mxu0 0.0
  %160 = vmatprep.subr.mxu0 0.0
  %161 = vmatpush1.xpose.msra.mxu0 0.0
  %162 = vmatprep.subr.mxu0 0.0
  %163 = vmatpush1.xpose.msra.mxu0 0.0
  %164 = vmatprep.subr.mxu0 0.0
  %165 = vmatpush1.xpose.msra.mxu0 0.0
  %166 = vmatprep.mubr.f32.mxu0 0.0
  %167 = vmatmul.mubr.f32.gmra.mrb[0].mxu0 %v52
  %v168 = vpop.f32.mrb[0].mxu0
  %v169 = vadd.f32 %v48, %v168
  %v170 = vpop.f32.mrb[0].mxu0
  %171 = vmatprep.mubr.f32.mxu0 0.0
  %172 = vmatmul.mubr.f32.gmra.mrb[0].mxu0 %v55
  %v173 = vpop.f32.mrb[0].mxu0
  %v174 = vadd.f32 %v48, %v173
  %v175 = vpop.f32.mrb[0].mxu0
  %176 = vmatprep.mubr.f32.mxu0 0.0
  %177 = vmatmul.mubr.f32.gmra.mrb[0].mxu0 %v58
  %v178 = vpop.f32.mrb[0].mxu0
  %v179 = vadd.f32 %v48, %v178
  %v180 = vpop.f32.mrb[0].mxu0
  %181 = vmatprep.mubr.f32.mxu0 0.0
  %182 = vmatmul.mubr.f32.gmra.mrb[0].mxu0 %v61
  %v183 = vpop.f32.mrb[0].mxu0
  %v184 = vadd.f32 %v48, %v183
  %v185 = vpop.f32.mrb[0].mxu0
  %186 = vmatprep.mubr.f32.mxu0 0.0
  %187 = vmatmul.mubr.f32.gmra.mrb[0].mxu0 %v64
  %v188 = vpop.f32.mrb[0].mxu0
  %v189 = vadd.f32 %v48, %v188
  %v190 = vpop.f32.mrb[0].mxu0
  %191 = vdwg.mxu0
  %v192 = vld [vmem:[%s6] sm:$0xff]
  %v193 = vld [vmem:[%s6 + $0x8] sm:$0xff]
  %v194 = vld [vmem:[%s6 + $0x10] sm:$0xff]
  %v195 = vld [vmem:[%s6 + $0x18] sm:$0xff]
  %v196 = vld [vmem:[%s6 + $0x20] sm:$0xff]
  %v197 = vld [vmem:[%s6 + $0x28] sm:$0xff]
  %v198 = vld [vmem:[%s6 + $0x30] sm:$0xff]
  %v199 = vld [vmem:[%s6 + $0x38] sm:$0xff]
  %v200 = vld [vmem:[%s6 + $0x40] sm:$0xf]
  %v201 = vld [vmem:[%s5] sm:$0xff]
  %v202 = vld [vmem:[%s5 + $0x8] sm:$0xff]
  %v203 = vld [vmem:[%s5 + $0x10] sm:$0xff]
  %v204 = vld [vmem:[%s5 + $0x18] sm:$0xff]
  %v205 = vld [vmem:[%s5 + $0x20] sm:$0xff]
  %v206 = vld [vmem:[%s5 + $0x28] sm:$0xff]
  %v207 = vld [vmem:[%s5 + $0x30] sm:$0xff]
  %v208 = vld [vmem:[%s5 + $0x38] sm:$0xff]
  %v209 = vld [vmem:[%s5 + $0x40] sm:$0xf]
  %vm213 = vcmask 1040384
  %v214 = vrot.slane %v169, 7
  %v215 = vrot.slane %v174, 7
  %v216 = vsel %vm213, %v214, %v215
  %v217 = vrot.slane %v179, 7
  %v218 = vsel %vm213, %v215, %v217
  %vm222 = vcmask 1041408
  %v223 = vrot.slane %v169, 6
  %v224 = vrot.slane %v174, 6
  %v225 = vsel %vm222, %v223, %v224
  %v226 = vrot.slane %v179, 6
  %v227 = vsel %vm222, %v224, %v226
  %vm231 = vcmask 1042432
  %v232 = vrot.slane %v169, 5
  %v233 = vrot.slane %v174, 5
  %v234 = vsel %vm231, %v232, %v233
  %v235 = vrot.slane %v179, 5
  %v236 = vsel %vm231, %v233, %v235
  %v240 = vsel %vm213, %v179, %v214
  %v241 = vsel %vm222, %v218, %v223
  %v242 = vsel %vm231, %v227, %v232
  %v243 = vmul.f32 %v169, %v192
  %v244 = vmul.f32 %v174, %v193
  %v245 = vmul.f32 %v240, %v194
  %v246 = vmul.f32 %v216, %v195
  %v247 = vmul.f32 %v241, %v196
  %v248 = vmul.f32 %v225, %v197
  %v249 = vmul.f32 %v242, %v198
  %v250 = vmul.f32 %v234, %v199
  %v251 = vmul.f32 %v236, %v200
  %252 = vrot.lane.b32.xlu0 %v169, 96
  %v253 = vpop.permute.xlu0 %252
  %254 = vrot.lane.b32.xlu0 %v174, 96
  %v255 = vpop.permute.xlu0 %254
  %256 = vrot.lane.b32.xlu0 %v179, 96
  %v257 = vpop.permute.xlu0 %256
  %v259 = vsel %vm50, %v243, 0
  %v262 = vsel %vm50, %v244, 0
  %v265 = vsel %vm50, %v245, 0
  %v268 = vsel %vm50, %v246, 0
  %v271 = vsel %vm50, %v247, 0
  %v274 = vsel %vm50, %v248, 0
  %v277 = vsel %vm50, %v249, 0
  %v280 = vsel %vm50, %v250, 0
  %v283 = vsel %vm50, %v251, 0
  %v285 = vsel %vm50, %v253, 0
  %v287 = vsel %vm50, %v255, 0
  %v289 = vsel %vm50, %v257, 0
  %291 = vmatprep.subr.mxu0 0.0
  %292 = vmatpush1.xpose.msra.mxu0 %v285
  %293 = vmatprep.subr.mxu0 0.0
  %294 = vmatpush1.xpose.msra.mxu0 %v287
  %295 = vmatprep.subr.mxu0 0.0
  %296 = vmatpush1.xpose.msra.mxu0 %v289
  %297 = vmatprep.subr.mxu0 0.0
  %298 = vmatpush1.xpose.msra.mxu0 0.0
  %299 = vmatprep.subr.mxu0 0.0
  %300 = vmatpush1.xpose.msra.mxu0 0.0
  %301 = vmatprep.subr.mxu0 0.0
  %302 = vmatpush1.xpose.msra.mxu0 0.0
  %303 = vmatprep.subr.mxu0 0.0
  %304 = vmatpush1.xpose.msra.mxu0 0.0
  %305 = vmatprep.subr.mxu0 0.0
  %306 = vmatpush1.xpose.msra.mxu0 0.0
  %307 = vmatprep.subr.mxu0 0.0
  %308 = vmatpush1.xpose.msra.mxu0 0.0
  %309 = vmatprep.subr.mxu0 0.0
  %310 = vmatpush1.xpose.msra.mxu0 0.0
  %311 = vmatprep.subr.mxu0 0.0
  %312 = vmatpush1.xpose.msra.mxu0 0.0
  %313 = vmatprep.subr.mxu0 0.0
  %314 = vmatpush1.xpose.msra.mxu0 0.0
  %315 = vmatprep.subr.mxu0 0.0
  %316 = vmatpush1.xpose.msra.mxu0 0.0
  %317 = vmatprep.subr.mxu0 0.0
  %318 = vmatpush1.xpose.msra.mxu0 0.0
  %319 = vmatprep.subr.mxu0 0.0
  %320 = vmatpush1.xpose.msra.mxu0 0.0
  %321 = vmatprep.subr.mxu0 0.0
  %322 = vmatpush1.xpose.msra.mxu0 0.0
  %323 = vmatprep.subr.mxu0 0.0
  %324 = vmatpush1.xpose.msra.mxu0 0.0
  %325 = vmatprep.subr.mxu0 0.0
  %326 = vmatpush1.xpose.msra.mxu0 0.0
  %327 = vmatprep.subr.mxu0 0.0
  %328 = vmatpush1.xpose.msra.mxu0 0.0
  %329 = vmatprep.subr.mxu0 0.0
  %330 = vmatpush1.xpose.msra.mxu0 0.0
  %331 = vmatprep.subr.mxu0 0.0
  %332 = vmatpush1.xpose.msra.mxu0 0.0
  %333 = vmatprep.subr.mxu0 0.0
  %334 = vmatpush1.xpose.msra.mxu0 0.0
  %335 = vmatprep.subr.mxu0 0.0
  %336 = vmatpush1.xpose.msra.mxu0 0.0
  %337 = vmatprep.subr.mxu0 0.0
  %338 = vmatpush1.xpose.msra.mxu0 0.0
  %339 = vmatprep.subr.mxu0 0.0
  %340 = vmatpush1.xpose.msra.mxu0 0.0
  %341 = vmatprep.subr.mxu0 0.0
  %342 = vmatpush1.xpose.msra.mxu0 0.0
  %343 = vmatprep.subr.mxu0 0.0
  %344 = vmatpush1.xpose.msra.mxu0 0.0
  %345 = vmatprep.subr.mxu0 0.0
  %346 = vmatpush1.xpose.msra.mxu0 0.0
  %347 = vmatprep.subr.mxu0 0.0
  %348 = vmatpush1.xpose.msra.mxu0 0.0
  %349 = vmatprep.subr.mxu0 0.0
  %350 = vmatpush1.xpose.msra.mxu0 0.0
  %351 = vmatprep.subr.mxu0 0.0
  %352 = vmatpush1.xpose.msra.mxu0 0.0
  %353 = vmatprep.subr.mxu0 0.0
  %354 = vmatpush1.xpose.msra.mxu0 0.0
  %355 = vmatprep.mubr.f32.mxu0 0.0
  %356 = vmatmul.mubr.f32.gmra.mrb[0].mxu0 %v259
  %v357 = vpop.f32.mrb[0].mxu0
  %v358 = vadd.f32 %v201, %v357
  %v359 = vpop.f32.mrb[0].mxu0
  %360 = vmatprep.mubr.f32.mxu0 0.0
  %361 = vmatmul.mubr.f32.gmra.mrb[0].mxu0 %v262
  %v362 = vpop.f32.mrb[0].mxu0
  %v363 = vadd.f32 %v202, %v362
  %v364 = vpop.f32.mrb[0].mxu0
  %365 = vmatprep.mubr.f32.mxu0 0.0
  %366 = vmatmul.mubr.f32.gmra.mrb[0].mxu0 %v265
  %v367 = vpop.f32.mrb[0].mxu0
  %v368 = vadd.f32 %v203, %v367
  %v369 = vpop.f32.mrb[0].mxu0
  %370 = vmatprep.mubr.f32.mxu0 0.0
  %371 = vmatmul.mubr.f32.gmra.mrb[0].mxu0 %v268
  %v372 = vpop.f32.mrb[0].mxu0
  %v373 = vadd.f32 %v204, %v372
  %v374 = vpop.f32.mrb[0].mxu0
  %375 = vmatprep.mubr.f32.mxu0 0.0
  %376 = vmatmul.mubr.f32.gmra.mrb[0].mxu0 %v271
  %v377 = vpop.f32.mrb[0].mxu0
  %v378 = vadd.f32 %v205, %v377
  %v379 = vpop.f32.mrb[0].mxu0
  %380 = vmatprep.mubr.f32.mxu0 0.0
  %381 = vmatmul.mubr.f32.gmra.mrb[0].mxu0 %v274
  %v382 = vpop.f32.mrb[0].mxu0
  %v383 = vadd.f32 %v206, %v382
  %v384 = vpop.f32.mrb[0].mxu0
  %385 = vmatprep.mubr.f32.mxu0 0.0
  %386 = vmatmul.mubr.f32.gmra.mrb[0].mxu0 %v277
  %v387 = vpop.f32.mrb[0].mxu0
  %v388 = vadd.f32 %v207, %v387
  %v389 = vpop.f32.mrb[0].mxu0
  %390 = vmatprep.mubr.f32.mxu0 0.0
  %391 = vmatmul.mubr.f32.gmra.mrb[0].mxu0 %v280
  %v392 = vpop.f32.mrb[0].mxu0
  %v393 = vadd.f32 %v208, %v392
  %v394 = vpop.f32.mrb[0].mxu0
  %395 = vmatprep.mubr.f32.mxu0 0.0
  %396 = vmatmul.mubr.f32.gmra.mrb[0].mxu0 %v283
  %v397 = vpop.f32.mrb[0].mxu0
  %v398 = vadd.f32 %v209, %v397
  %v399 = vpop.f32.mrb[0].mxu0
  %400 = vdwg.mxu0
  %vm401 = vcmask 138240
  %v402 = vsel %vm401, %v358, -inf
  %403 = vmax.xlane.f32.xlu0 %v402
  %v404 = vpop.xlane.xlu0 %403
  %v405 = vsel %vm401, %v363, -inf
  %406 = vmax.xlane.f32.xlu0 %v405
  %v407 = vpop.xlane.xlu0 %406
  %v408 = vsel %vm401, %v368, -inf
  %409 = vmax.xlane.f32.xlu0 %v408
  %v410 = vpop.xlane.xlu0 %409
  %v411 = vsel %vm401, %v373, -inf
  %412 = vmax.xlane.f32.xlu0 %v411
  %v413 = vpop.xlane.xlu0 %412
  %v414 = vsel %vm401, %v378, -inf
  %415 = vmax.xlane.f32.xlu0 %v414
  %v416 = vpop.xlane.xlu0 %415
  %v417 = vsel %vm401, %v383, -inf
  %418 = vmax.xlane.f32.xlu0 %v417
  %v419 = vpop.xlane.xlu0 %418
  %v420 = vsel %vm401, %v388, -inf
  %421 = vmax.xlane.f32.xlu0 %v420
  %v422 = vpop.xlane.xlu0 %421
  %v423 = vsel %vm401, %v393, -inf
  %424 = vmax.xlane.f32.xlu0 %v423
  %v425 = vpop.xlane.xlu0 %424
  %vm426 = vcmask 134144
  %v427 = vsel %vm426, %v398, -inf
  %428 = vmax.xlane.f32.xlu0 %v427
  %v429 = vpop.xlane.xlu0 %428
  %v430 = vsub.f32 %v358, %v404
  %v431 = vsub.f32 %v363, %v407
  %v432 = vsub.f32 %v368, %v410
  %v433 = vsub.f32 %v373, %v413
  %v434 = vsub.f32 %v378, %v416
  %v435 = vsub.f32 %v383, %v419
  %v436 = vsub.f32 %v388, %v422
  %v437 = vsub.f32 %v393, %v425
  %v438 = vsub.f32 %v398, %v429
  %v439 = vmul.f32 %v430, 1.442695
  %v440 = vpow.pop %v439
  %v441 = vmul.f32 %v431, 1.442695
  %v442 = vpow.pop %v441
  %v443 = vmul.f32 %v432, 1.442695
  %v444 = vpow.pop %v443
  %v445 = vmul.f32 %v433, 1.442695
  %v446 = vpow.pop %v445
  %v447 = vmul.f32 %v434, 1.442695
  %v448 = vpow.pop %v447
  %v449 = vmul.f32 %v435, 1.442695
  %v450 = vpow.pop %v449
  %v451 = vmul.f32 %v436, 1.442695
  %v452 = vpow.pop %v451
  %v453 = vmul.f32 %v437, 1.442695
  %v454 = vpow.pop %v453
  %v455 = vmul.f32 %v438, 1.442695
  %v456 = vpow.pop %v455
  %v457 = vsel %vm401, %v440, 0.0
  %458 = vadd.xlane.f32.xlu0 %v457
  %v459 = vpop.xlane.xlu0 %458
  %v460 = vsel %vm401, %v442, 0.0
  %461 = vadd.xlane.f32.xlu0 %v460
  %v462 = vpop.xlane.xlu0 %461
  %v463 = vsel %vm401, %v444, 0.0
  %464 = vadd.xlane.f32.xlu0 %v463
  %v465 = vpop.xlane.xlu0 %464
  %v466 = vsel %vm401, %v446, 0.0
  %467 = vadd.xlane.f32.xlu0 %v466
  %v468 = vpop.xlane.xlu0 %467
  %v469 = vsel %vm401, %v448, 0.0
  %470 = vadd.xlane.f32.xlu0 %v469
  %v471 = vpop.xlane.xlu0 %470
  %v472 = vsel %vm401, %v450, 0.0
  %473 = vadd.xlane.f32.xlu0 %v472
  %v474 = vpop.xlane.xlu0 %473
  %v475 = vsel %vm401, %v452, 0.0
  %476 = vadd.xlane.f32.xlu0 %v475
  %v477 = vpop.xlane.xlu0 %476
  %v478 = vsel %vm401, %v454, 0.0
  %479 = vadd.xlane.f32.xlu0 %v478
  %v480 = vpop.xlane.xlu0 %479
  %v481 = vsel %vm426, %v456, 0.0
  %482 = vadd.xlane.f32.xlu0 %v481
  %v483 = vpop.xlane.xlu0 %482
  %v484 = vrcp.pop %v459
  %v485 = vrcp.pop %v462
  %v486 = vrcp.pop %v465
  %v487 = vrcp.pop %v468
  %v488 = vrcp.pop %v471
  %v489 = vrcp.pop %v474
  %v490 = vrcp.pop %v477
  %v491 = vrcp.pop %v480
  %v492 = vrcp.pop %v483
  %v493 = vmul.f32 %v440, %v484
  %v494 = vmul.f32 %v442, %v485
  %v495 = vmul.f32 %v444, %v486
  %v496 = vmul.f32 %v446, %v487
  %v497 = vmul.f32 %v448, %v488
  %v498 = vmul.f32 %v450, %v489
  %v499 = vmul.f32 %v452, %v490
  %v500 = vmul.f32 %v454, %v491
  %v501 = vmul.f32 %v456, %v492
  %502 = vrot.lane.b32.xlu0 %v169, 64
  %v503 = vpop.permute.xlu0 %502
  %504 = vrot.lane.b32.xlu0 %v174, 64
  %v505 = vpop.permute.xlu0 %504
  %506 = vrot.lane.b32.xlu0 %v179, 64
  %v507 = vpop.permute.xlu0 %506
  %v511 = vsel %vm401, %v493, 0
  %v514 = vsel %vm401, %v494, 0
  %v517 = vsel %vm401, %v495, 0
  %v520 = vsel %vm401, %v496, 0
  %v523 = vsel %vm401, %v497, 0
  %v526 = vsel %vm401, %v498, 0
  %v529 = vsel %vm401, %v499, 0
  %v532 = vsel %vm401, %v500, 0
  %v535 = vsel %vm401, %v501, 0
  %v537 = vsel %vm213, %v507, 0
  %539 = vmatprep.subr.mxu0 0.0
  %540 = vmatpush1.msra.mxu0 %v503
  %541 = vmatprep.subr.mxu0 0.0
  %542 = vmatpush1.msra.mxu0 %v505
  %543 = vmatprep.subr.mxu0 0.0
  %544 = vmatpush1.msra.mxu0 %v537
  %545 = vmatprep.subr.mxu0 0.0
  %546 = vmatpush1.msra.mxu0 0.0
  %547 = vmatprep.subr.mxu0 0.0
  %548 = vmatpush1.msra.mxu0 0.0
  %549 = vmatprep.subr.mxu0 0.0
  %550 = vmatpush1.msra.mxu0 0.0
  %551 = vmatprep.subr.mxu0 0.0
  %552 = vmatpush1.msra.mxu0 0.0
  %553 = vmatprep.subr.mxu0 0.0
  %554 = vmatpush1.msra.mxu0 0.0
  %555 = vmatprep.subr.mxu0 0.0
  %556 = vmatpush1.msra.mxu0 0.0
  %557 = vmatprep.subr.mxu0 0.0
  %558 = vmatpush1.msra.mxu0 0.0
  %559 = vmatprep.subr.mxu0 0.0
  %560 = vmatpush1.msra.mxu0 0.0
  %561 = vmatprep.subr.mxu0 0.0
  %562 = vmatpush1.msra.mxu0 0.0
  %563 = vmatprep.subr.mxu0 0.0
  %564 = vmatpush1.msra.mxu0 0.0
  %565 = vmatprep.subr.mxu0 0.0
  %566 = vmatpush1.msra.mxu0 0.0
  %567 = vmatprep.subr.mxu0 0.0
  %568 = vmatpush1.msra.mxu0 0.0
  %569 = vmatprep.subr.mxu0 0.0
  %570 = vmatpush1.msra.mxu0 0.0
  %571 = vmatprep.subr.mxu0 0.0
  %572 = vmatpush1.msra.mxu0 0.0
  %573 = vmatprep.subr.mxu0 0.0
  %574 = vmatpush1.msra.mxu0 0.0
  %575 = vmatprep.subr.mxu0 0.0
  %576 = vmatpush1.msra.mxu0 0.0
  %577 = vmatprep.subr.mxu0 0.0
  %578 = vmatpush1.msra.mxu0 0.0
  %579 = vmatprep.subr.mxu0 0.0
  %580 = vmatpush1.msra.mxu0 0.0
  %581 = vmatprep.subr.mxu0 0.0
  %582 = vmatpush1.msra.mxu0 0.0
  %583 = vmatprep.subr.mxu0 0.0
  %584 = vmatpush1.msra.mxu0 0.0
  %585 = vmatprep.subr.mxu0 0.0
  %586 = vmatpush1.msra.mxu0 0.0
  %587 = vmatprep.subr.mxu0 0.0
  %588 = vmatpush1.msra.mxu0 0.0
  %589 = vmatprep.subr.mxu0 0.0
  %590 = vmatpush1.msra.mxu0 0.0
  %591 = vmatprep.subr.mxu0 0.0
  %592 = vmatpush1.msra.mxu0 0.0
  %593 = vmatprep.subr.mxu0 0.0
  %594 = vmatpush1.msra.mxu0 0.0
  %595 = vmatprep.subr.mxu0 0.0
  %596 = vmatpush1.msra.mxu0 0.0
  %597 = vmatprep.subr.mxu0 0.0
  %598 = vmatpush1.msra.mxu0 0.0
  %599 = vmatprep.subr.mxu0 0.0
  %600 = vmatpush1.msra.mxu0 0.0
  %601 = vmatprep.subr.mxu0 0.0
  %602 = vmatpush1.msra.mxu0 0.0
  %603 = vmatprep.mubr.f32.mxu0 0.0
  %604 = vmatmul.mubr.f32.gmra.mrb[0].mxu0 %v511
  %v605 = vpop.f32.mrb[0].mxu0
  %v606 = vadd.f32 0.0, %v605
  %v607 = vpop.f32.mrb[0].mxu0
  %608 = vmatprep.mubr.f32.mxu0 0.0
  %609 = vmatmul.mubr.f32.gmra.mrb[0].mxu0 %v514
  %v610 = vpop.f32.mrb[0].mxu0
  %v611 = vadd.f32 0.0, %v610
  %v612 = vpop.f32.mrb[0].mxu0
  %613 = vmatprep.mubr.f32.mxu0 0.0
  %614 = vmatmul.mubr.f32.gmra.mrb[0].mxu0 %v517
  %v615 = vpop.f32.mrb[0].mxu0
  %v616 = vadd.f32 0.0, %v615
  %v617 = vpop.f32.mrb[0].mxu0
  %618 = vmatprep.mubr.f32.mxu0 0.0
  %619 = vmatmul.mubr.f32.gmra.mrb[0].mxu0 %v520
  %v620 = vpop.f32.mrb[0].mxu0
  %v621 = vadd.f32 0.0, %v620
  %v622 = vpop.f32.mrb[0].mxu0
  %623 = vmatprep.mubr.f32.mxu0 0.0
  %624 = vmatmul.mubr.f32.gmra.mrb[0].mxu0 %v523
  %v625 = vpop.f32.mrb[0].mxu0
  %v626 = vadd.f32 0.0, %v625
  %v627 = vpop.f32.mrb[0].mxu0
  %628 = vmatprep.mubr.f32.mxu0 0.0
  %629 = vmatmul.mubr.f32.gmra.mrb[0].mxu0 %v526
  %v630 = vpop.f32.mrb[0].mxu0
  %v631 = vadd.f32 0.0, %v630
  %v632 = vpop.f32.mrb[0].mxu0
  %633 = vmatprep.mubr.f32.mxu0 0.0
  %634 = vmatmul.mubr.f32.gmra.mrb[0].mxu0 %v529
  %v635 = vpop.f32.mrb[0].mxu0
  %v636 = vadd.f32 0.0, %v635
  %v637 = vpop.f32.mrb[0].mxu0
  %638 = vmatprep.mubr.f32.mxu0 0.0
  %639 = vmatmul.mubr.f32.gmra.mrb[0].mxu0 %v532
  %v640 = vpop.f32.mrb[0].mxu0
  %v641 = vadd.f32 0.0, %v640
  %v642 = vpop.f32.mrb[0].mxu0
  %643 = vmatprep.mubr.f32.mxu0 0.0
  %644 = vmatmul.mubr.f32.gmra.mrb[0].mxu0 %v535
  %v645 = vpop.f32.mrb[0].mxu0
  %v646 = vadd.f32 0.0, %v645
  %v647 = vpop.f32.mrb[0].mxu0
  %648 = vdwg.mxu0
  %v649 = vmul.f32 %v606, %v192
  %v650 = vmul.f32 %v611, %v193
  %v651 = vmul.f32 %v616, %v194
  %v652 = vmul.f32 %v621, %v195
  %v653 = vmul.f32 %v626, %v196
  %v654 = vmul.f32 %v631, %v197
  %v655 = vmul.f32 %v636, %v198
  %v656 = vmul.f32 %v641, %v199
  %v657 = vmul.f32 %v646, %v200
  %vm661 = vcmask 1046528
  %v662 = vrot.slane %v651, 1
  %v663 = vrot.slane %v652, 1
  %v664 = vsel %vm661, %v662, %v663
  %v665 = vrot.slane %v653, 1
  %v666 = vsel %vm661, %v663, %v665
  %v670 = vadd.f32 %v649, %v664
  %v671 = vadd.f32 %v650, %v666
  %v672 = vadd.f32 %v651, %v665
  %vm675 = vcmask 1045504
  %v676 = vrot.slane %v653, 2
  %v677 = vrot.slane %v654, 2
  %v678 = vsel %vm675, %v676, %v677
  %v679 = vrot.slane %v655, 2
  %v680 = vsel %vm675, %v677, %v679
  %v684 = vadd.f32 %v670, %v678
  %v685 = vadd.f32 %v671, %v680
  %v686 = vadd.f32 %v672, %v679
  %vm689 = vcmask 1044480
  %v690 = vrot.slane %v655, 3
  %v691 = vrot.slane %v656, 3
  %v692 = vsel %vm689, %v690, %v691
  %v693 = vrot.slane %v657, 3
  %v694 = vsel %vm689, %v691, %v693
  %v698 = vadd.f32 %v684, %v692
  %v699 = vadd.f32 %v685, %v694
  %v700 = vadd.f32 %v686, %v693
  %v703 = vrot.slane %v179, 1
  %v704 = vrot.slane %v184, 1
  %v705 = vsel %vm661, %v703, %v704
  %v706 = vrot.slane %v189, 1
  %v707 = vsel %vm661, %v704, %v706
  %v711 = vrot.slane %v184, 7
  %v712 = vsel %vm213, %v217, %v711
  %v713 = vrot.slane %v189, 7
  %v714 = vsel %vm213, %v711, %v713
  %v718 = vrot.slane %v184, 6
  %v719 = vsel %vm222, %v226, %v718
  %v720 = vrot.slane %v189, 6
  %v721 = vsel %vm222, %v718, %v720
  %v725 = vsel %vm213, %v706, %v179
  %v726 = vsel %vm222, %v189, %v217
  %v727 = vsel %vm231, %v714, %v226
  %v728 = vmul.f32 %v705, %v192
  %v729 = vmul.f32 %v707, %v193
  %v730 = vmul.f32 %v725, %v194
  %v731 = vmul.f32 %v184, %v195
  %v732 = vmul.f32 %v726, %v196
  %v733 = vmul.f32 %v712, %v197
  %v734 = vmul.f32 %v727, %v198
  %v735 = vmul.f32 %v719, %v199
  %v736 = vmul.f32 %v721, %v200
  %737 = vrot.lane.b32.xlu0 %v705, 96
  %v738 = vpop.permute.xlu0 %737
  %739 = vrot.lane.b32.xlu0 %v707, 96
  %v740 = vpop.permute.xlu0 %739
  %741 = vrot.lane.b32.xlu0 %v706, 96
  %v742 = vpop.permute.xlu0 %741
  %v744 = vsel %vm50, %v728, 0
  %v747 = vsel %vm50, %v729, 0
  %v750 = vsel %vm50, %v730, 0
  %v753 = vsel %vm50, %v731, 0
  %v756 = vsel %vm50, %v732, 0
  %v759 = vsel %vm50, %v733, 0
  %v762 = vsel %vm50, %v734, 0
  %v765 = vsel %vm50, %v735, 0
  %v768 = vsel %vm50, %v736, 0
  %v770 = vsel %vm50, %v738, 0
  %v772 = vsel %vm50, %v740, 0
  %v774 = vsel %vm50, %v742, 0
  %776 = vmatprep.subr.mxu0 0.0
  %777 = vmatpush1.xpose.msra.mxu0 %v770
  %778 = vmatprep.subr.mxu0 0.0
  %779 = vmatpush1.xpose.msra.mxu0 %v772
  %780 = vmatprep.subr.mxu0 0.0
  %781 = vmatpush1.xpose.msra.mxu0 %v774
  %782 = vmatprep.subr.mxu0 0.0
  %783 = vmatpush1.xpose.msra.mxu0 0.0
  %784 = vmatprep.subr.mxu0 0.0
  %785 = vmatpush1.xpose.msra.mxu0 0.0
  %786 = vmatprep.subr.mxu0 0.0
  %787 = vmatpush1.xpose.msra.mxu0 0.0
  %788 = vmatprep.subr.mxu0 0.0
  %789 = vmatpush1.xpose.msra.mxu0 0.0
  %790 = vmatprep.subr.mxu0 0.0
  %791 = vmatpush1.xpose.msra.mxu0 0.0
  %792 = vmatprep.subr.mxu0 0.0
  %793 = vmatpush1.xpose.msra.mxu0 0.0
  %794 = vmatprep.subr.mxu0 0.0
  %795 = vmatpush1.xpose.msra.mxu0 0.0
  %796 = vmatprep.subr.mxu0 0.0
  %797 = vmatpush1.xpose.msra.mxu0 0.0
  %798 = vmatprep.subr.mxu0 0.0
  %799 = vmatpush1.xpose.msra.mxu0 0.0
  %800 = vmatprep.subr.mxu0 0.0
  %801 = vmatpush1.xpose.msra.mxu0 0.0
  %802 = vmatprep.subr.mxu0 0.0
  %803 = vmatpush1.xpose.msra.mxu0 0.0
  %804 = vmatprep.subr.mxu0 0.0
  %805 = vmatpush1.xpose.msra.mxu0 0.0
  %806 = vmatprep.subr.mxu0 0.0
  %807 = vmatpush1.xpose.msra.mxu0 0.0
  %808 = vmatprep.subr.mxu0 0.0
  %809 = vmatpush1.xpose.msra.mxu0 0.0
  %810 = vmatprep.subr.mxu0 0.0
  %811 = vmatpush1.xpose.msra.mxu0 0.0
  %812 = vmatprep.subr.mxu0 0.0
  %813 = vmatpush1.xpose.msra.mxu0 0.0
  %814 = vmatprep.subr.mxu0 0.0
  %815 = vmatpush1.xpose.msra.mxu0 0.0
  %816 = vmatprep.subr.mxu0 0.0
  %817 = vmatpush1.xpose.msra.mxu0 0.0
  %818 = vmatprep.subr.mxu0 0.0
  %819 = vmatpush1.xpose.msra.mxu0 0.0
  %820 = vmatprep.subr.mxu0 0.0
  %821 = vmatpush1.xpose.msra.mxu0 0.0
  %822 = vmatprep.subr.mxu0 0.0
  %823 = vmatpush1.xpose.msra.mxu0 0.0
  %824 = vmatprep.subr.mxu0 0.0
  %825 = vmatpush1.xpose.msra.mxu0 0.0
  %826 = vmatprep.subr.mxu0 0.0
  %827 = vmatpush1.xpose.msra.mxu0 0.0
  %828 = vmatprep.subr.mxu0 0.0
  %829 = vmatpush1.xpose.msra.mxu0 0.0
  %830 = vmatprep.subr.mxu0 0.0
  %831 = vmatpush1.xpose.msra.mxu0 0.0
  %832 = vmatprep.subr.mxu0 0.0
  %833 = vmatpush1.xpose.msra.mxu0 0.0
  %834 = vmatprep.subr.mxu0 0.0
  %835 = vmatpush1.xpose.msra.mxu0 0.0
  %836 = vmatprep.subr.mxu0 0.0
  %837 = vmatpush1.xpose.msra.mxu0 0.0
  %838 = vmatprep.subr.mxu0 0.0
  %839 = vmatpush1.xpose.msra.mxu0 0.0
  %840 = vmatprep.mubr.f32.mxu0 0.0
  %841 = vmatmul.mubr.f32.gmra.mrb[0].mxu0 %v744
  %v842 = vpop.f32.mrb[0].mxu0
  %v843 = vadd.f32 %v201, %v842
  %v844 = vpop.f32.mrb[0].mxu0
  %845 = vmatprep.mubr.f32.mxu0 0.0
  %846 = vmatmul.mubr.f32.gmra.mrb[0].mxu0 %v747
  %v847 = vpop.f32.mrb[0].mxu0
  %v848 = vadd.f32 %v202, %v847
  %v849 = vpop.f32.mrb[0].mxu0
  %850 = vmatprep.mubr.f32.mxu0 0.0
  %851 = vmatmul.mubr.f32.gmra.mrb[0].mxu0 %v750
  %v852 = vpop.f32.mrb[0].mxu0
  %v853 = vadd.f32 %v203, %v852
  %v854 = vpop.f32.mrb[0].mxu0
  %855 = vmatprep.mubr.f32.mxu0 0.0
  %856 = vmatmul.mubr.f32.gmra.mrb[0].mxu0 %v753
  %v857 = vpop.f32.mrb[0].mxu0
  %v858 = vadd.f32 %v204, %v857
  %v859 = vpop.f32.mrb[0].mxu0
  %860 = vmatprep.mubr.f32.mxu0 0.0
  %861 = vmatmul.mubr.f32.gmra.mrb[0].mxu0 %v756
  %v862 = vpop.f32.mrb[0].mxu0
  %v863 = vadd.f32 %v205, %v862
  %v864 = vpop.f32.mrb[0].mxu0
  %865 = vmatprep.mubr.f32.mxu0 0.0
  %866 = vmatmul.mubr.f32.gmra.mrb[0].mxu0 %v759
  %v867 = vpop.f32.mrb[0].mxu0
  %v868 = vadd.f32 %v206, %v867
  %v869 = vpop.f32.mrb[0].mxu0
  %870 = vmatprep.mubr.f32.mxu0 0.0
  %871 = vmatmul.mubr.f32.gmra.mrb[0].mxu0 %v762
  %v872 = vpop.f32.mrb[0].mxu0
  %v873 = vadd.f32 %v207, %v872
  %v874 = vpop.f32.mrb[0].mxu0
  %875 = vmatprep.mubr.f32.mxu0 0.0
  %876 = vmatmul.mubr.f32.gmra.mrb[0].mxu0 %v765
  %v877 = vpop.f32.mrb[0].mxu0
  %v878 = vadd.f32 %v208, %v877
  %v879 = vpop.f32.mrb[0].mxu0
  %880 = vmatprep.mubr.f32.mxu0 0.0
  %881 = vmatmul.mubr.f32.gmra.mrb[0].mxu0 %v768
  %v882 = vpop.f32.mrb[0].mxu0
  %v883 = vadd.f32 %v209, %v882
  %v884 = vpop.f32.mrb[0].mxu0
  %885 = vdwg.mxu0
  %v886 = vsel %vm401, %v843, -inf
  %887 = vmax.xlane.f32.xlu0 %v886
  %v888 = vpop.xlane.xlu0 %887
  %v889 = vsel %vm401, %v848, -inf
  %890 = vmax.xlane.f32.xlu0 %v889
  %v891 = vpop.xlane.xlu0 %890
  %v892 = vsel %vm401, %v853, -inf
  %893 = vmax.xlane.f32.xlu0 %v892
  %v894 = vpop.xlane.xlu0 %893
  %v895 = vsel %vm401, %v858, -inf
  %896 = vmax.xlane.f32.xlu0 %v895
  %v897 = vpop.xlane.xlu0 %896
  %v898 = vsel %vm401, %v863, -inf
  %899 = vmax.xlane.f32.xlu0 %v898
  %v900 = vpop.xlane.xlu0 %899
  %v901 = vsel %vm401, %v868, -inf
  %902 = vmax.xlane.f32.xlu0 %v901
  %v903 = vpop.xlane.xlu0 %902
  %v904 = vsel %vm401, %v873, -inf
  %905 = vmax.xlane.f32.xlu0 %v904
  %v906 = vpop.xlane.xlu0 %905
  %v907 = vsel %vm401, %v878, -inf
  %908 = vmax.xlane.f32.xlu0 %v907
  %v909 = vpop.xlane.xlu0 %908
  %v910 = vsel %vm426, %v883, -inf
  %911 = vmax.xlane.f32.xlu0 %v910
  %v912 = vpop.xlane.xlu0 %911
  %v913 = vsub.f32 %v843, %v888
  %v914 = vsub.f32 %v848, %v891
  %v915 = vsub.f32 %v853, %v894
  %v916 = vsub.f32 %v858, %v897
  %v917 = vsub.f32 %v863, %v900
  %v918 = vsub.f32 %v868, %v903
  %v919 = vsub.f32 %v873, %v906
  %v920 = vsub.f32 %v878, %v909
  %v921 = vsub.f32 %v883, %v912
  %v922 = vmul.f32 %v913, 1.442695
  %v923 = vpow.pop %v922
  %v924 = vmul.f32 %v914, 1.442695
  %v925 = vpow.pop %v924
  %v926 = vmul.f32 %v915, 1.442695
  %v927 = vpow.pop %v926
  %v928 = vmul.f32 %v916, 1.442695
  %v929 = vpow.pop %v928
  %v930 = vmul.f32 %v917, 1.442695
  %v931 = vpow.pop %v930
  %v932 = vmul.f32 %v918, 1.442695
  %v933 = vpow.pop %v932
  %v934 = vmul.f32 %v919, 1.442695
  %v935 = vpow.pop %v934
  %v936 = vmul.f32 %v920, 1.442695
  %v937 = vpow.pop %v936
  %v938 = vmul.f32 %v921, 1.442695
  %v939 = vpow.pop %v938
  %v940 = vsel %vm401, %v923, 0.0
  %941 = vadd.xlane.f32.xlu0 %v940
  %v942 = vpop.xlane.xlu0 %941
  %v943 = vsel %vm401, %v925, 0.0
  %944 = vadd.xlane.f32.xlu0 %v943
  %v945 = vpop.xlane.xlu0 %944
  %v946 = vsel %vm401, %v927, 0.0
  %947 = vadd.xlane.f32.xlu0 %v946
  %v948 = vpop.xlane.xlu0 %947
  %v949 = vsel %vm401, %v929, 0.0
  %950 = vadd.xlane.f32.xlu0 %v949
  %v951 = vpop.xlane.xlu0 %950
  %v952 = vsel %vm401, %v931, 0.0
  %953 = vadd.xlane.f32.xlu0 %v952
  %v954 = vpop.xlane.xlu0 %953
  %v955 = vsel %vm401, %v933, 0.0
  %956 = vadd.xlane.f32.xlu0 %v955
  %v957 = vpop.xlane.xlu0 %956
  %v958 = vsel %vm401, %v935, 0.0
  %959 = vadd.xlane.f32.xlu0 %v958
  %v960 = vpop.xlane.xlu0 %959
  %v961 = vsel %vm401, %v937, 0.0
  %962 = vadd.xlane.f32.xlu0 %v961
  %v963 = vpop.xlane.xlu0 %962
  %v964 = vsel %vm426, %v939, 0.0
  %965 = vadd.xlane.f32.xlu0 %v964
  %v966 = vpop.xlane.xlu0 %965
  %v967 = vrcp.pop %v942
  %v968 = vrcp.pop %v945
  %v969 = vrcp.pop %v948
  %v970 = vrcp.pop %v951
  %v971 = vrcp.pop %v954
  %v972 = vrcp.pop %v957
  %v973 = vrcp.pop %v960
  %v974 = vrcp.pop %v963
  %v975 = vrcp.pop %v966
  %v976 = vmul.f32 %v923, %v967
  %v977 = vmul.f32 %v925, %v968
  %v978 = vmul.f32 %v927, %v969
  %v979 = vmul.f32 %v929, %v970
  %v980 = vmul.f32 %v931, %v971
  %v981 = vmul.f32 %v933, %v972
  %v982 = vmul.f32 %v935, %v973
  %v983 = vmul.f32 %v937, %v974
  %v984 = vmul.f32 %v939, %v975
  %985 = vrot.lane.b32.xlu0 %v705, 64
  %v986 = vpop.permute.xlu0 %985
  %987 = vrot.lane.b32.xlu0 %v707, 64
  %v988 = vpop.permute.xlu0 %987
  %989 = vrot.lane.b32.xlu0 %v706, 64
  %v990 = vpop.permute.xlu0 %989
  %v994 = vsel %vm401, %v976, 0
  %v997 = vsel %vm401, %v977, 0
  %v1000 = vsel %vm401, %v978, 0
  %v1003 = vsel %vm401, %v979, 0
  %v1006 = vsel %vm401, %v980, 0
  %v1009 = vsel %vm401, %v981, 0
  %v1012 = vsel %vm401, %v982, 0
  %v1015 = vsel %vm401, %v983, 0
  %v1018 = vsel %vm401, %v984, 0
  %v1020 = vsel %vm213, %v990, 0
  %1022 = vmatprep.subr.mxu0 0.0
  %1023 = vmatpush1.msra.mxu0 %v986
  %1024 = vmatprep.subr.mxu0 0.0
  %1025 = vmatpush1.msra.mxu0 %v988
  %1026 = vmatprep.subr.mxu0 0.0
  %1027 = vmatpush1.msra.mxu0 %v1020
  %1028 = vmatprep.subr.mxu0 0.0
  %1029 = vmatpush1.msra.mxu0 0.0
  %1030 = vmatprep.subr.mxu0 0.0
  %1031 = vmatpush1.msra.mxu0 0.0
  %1032 = vmatprep.subr.mxu0 0.0
  %1033 = vmatpush1.msra.mxu0 0.0
  %1034 = vmatprep.subr.mxu0 0.0
  %1035 = vmatpush1.msra.mxu0 0.0
  %1036 = vmatprep.subr.mxu0 0.0
  %1037 = vmatpush1.msra.mxu0 0.0
  %1038 = vmatprep.subr.mxu0 0.0
  %1039 = vmatpush1.msra.mxu0 0.0
  %1040 = vmatprep.subr.mxu0 0.0
  %1041 = vmatpush1.msra.mxu0 0.0
  %1042 = vmatprep.subr.mxu0 0.0
  %1043 = vmatpush1.msra.mxu0 0.0
  %1044 = vmatprep.subr.mxu0 0.0
  %1045 = vmatpush1.msra.mxu0 0.0
  %1046 = vmatprep.subr.mxu0 0.0
  %1047 = vmatpush1.msra.mxu0 0.0
  %1048 = vmatprep.subr.mxu0 0.0
  %1049 = vmatpush1.msra.mxu0 0.0
  %1050 = vmatprep.subr.mxu0 0.0
  %1051 = vmatpush1.msra.mxu0 0.0
  %1052 = vmatprep.subr.mxu0 0.0
  %1053 = vmatpush1.msra.mxu0 0.0
  %1054 = vmatprep.subr.mxu0 0.0
  %1055 = vmatpush1.msra.mxu0 0.0
  %1056 = vmatprep.subr.mxu0 0.0
  %1057 = vmatpush1.msra.mxu0 0.0
  %1058 = vmatprep.subr.mxu0 0.0
  %1059 = vmatpush1.msra.mxu0 0.0
  %1060 = vmatprep.subr.mxu0 0.0
  %1061 = vmatpush1.msra.mxu0 0.0
  %1062 = vmatprep.subr.mxu0 0.0
  %1063 = vmatpush1.msra.mxu0 0.0
  %1064 = vmatprep.subr.mxu0 0.0
  %1065 = vmatpush1.msra.mxu0 0.0
  %1066 = vmatprep.subr.mxu0 0.0
  %1067 = vmatpush1.msra.mxu0 0.0
  %1068 = vmatprep.subr.mxu0 0.0
  %1069 = vmatpush1.msra.mxu0 0.0
  %1070 = vmatprep.subr.mxu0 0.0
  %1071 = vmatpush1.msra.mxu0 0.0
  %1072 = vmatprep.subr.mxu0 0.0
  %1073 = vmatpush1.msra.mxu0 0.0
  %1074 = vmatprep.subr.mxu0 0.0
  %1075 = vmatpush1.msra.mxu0 0.0
  %1076 = vmatprep.subr.mxu0 0.0
  %1077 = vmatpush1.msra.mxu0 0.0
  %1078 = vmatprep.subr.mxu0 0.0
  %1079 = vmatpush1.msra.mxu0 0.0
  %1080 = vmatprep.subr.mxu0 0.0
  %1081 = vmatpush1.msra.mxu0 0.0
  %1082 = vmatprep.subr.mxu0 0.0
  %1083 = vmatpush1.msra.mxu0 0.0
  %1084 = vmatprep.subr.mxu0 0.0
  %1085 = vmatpush1.msra.mxu0 0.0
  %1086 = vmatprep.mubr.f32.mxu0 0.0
  %1087 = vmatmul.mubr.f32.gmra.mrb[0].mxu0 %v994
  %v1088 = vpop.f32.mrb[0].mxu0
  %v1089 = vadd.f32 0.0, %v1088
  %v1090 = vpop.f32.mrb[0].mxu0
  %1091 = vmatprep.mubr.f32.mxu0 0.0
  %1092 = vmatmul.mubr.f32.gmra.mrb[0].mxu0 %v997
  %v1093 = vpop.f32.mrb[0].mxu0
  %v1094 = vadd.f32 0.0, %v1093
  %v1095 = vpop.f32.mrb[0].mxu0
  %1096 = vmatprep.mubr.f32.mxu0 0.0
  %1097 = vmatmul.mubr.f32.gmra.mrb[0].mxu0 %v1000
  %v1098 = vpop.f32.mrb[0].mxu0
  %v1099 = vadd.f32 0.0, %v1098
  %v1100 = vpop.f32.mrb[0].mxu0
  %1101 = vmatprep.mubr.f32.mxu0 0.0
  %1102 = vmatmul.mubr.f32.gmra.mrb[0].mxu0 %v1003
  %v1103 = vpop.f32.mrb[0].mxu0
  %v1104 = vadd.f32 0.0, %v1103
  %v1105 = vpop.f32.mrb[0].mxu0
  %1106 = vmatprep.mubr.f32.mxu0 0.0
  %1107 = vmatmul.mubr.f32.gmra.mrb[0].mxu0 %v1006
  %v1108 = vpop.f32.mrb[0].mxu0
  %v1109 = vadd.f32 0.0, %v1108
  %v1110 = vpop.f32.mrb[0].mxu0
  %1111 = vmatprep.mubr.f32.mxu0 0.0
  %1112 = vmatmul.mubr.f32.gmra.mrb[0].mxu0 %v1009
  %v1113 = vpop.f32.mrb[0].mxu0
  %v1114 = vadd.f32 0.0, %v1113
  %v1115 = vpop.f32.mrb[0].mxu0
  %1116 = vmatprep.mubr.f32.mxu0 0.0
  %1117 = vmatmul.mubr.f32.gmra.mrb[0].mxu0 %v1012
  %v1118 = vpop.f32.mrb[0].mxu0
  %v1119 = vadd.f32 0.0, %v1118
  %v1120 = vpop.f32.mrb[0].mxu0
  %1121 = vmatprep.mubr.f32.mxu0 0.0
  %1122 = vmatmul.mubr.f32.gmra.mrb[0].mxu0 %v1015
  %v1123 = vpop.f32.mrb[0].mxu0
  %v1124 = vadd.f32 0.0, %v1123
  %v1125 = vpop.f32.mrb[0].mxu0
  %1126 = vmatprep.mubr.f32.mxu0 0.0
  %1127 = vmatmul.mubr.f32.gmra.mrb[0].mxu0 %v1018
  %v1128 = vpop.f32.mrb[0].mxu0
  %v1129 = vadd.f32 0.0, %v1128
  %v1130 = vpop.f32.mrb[0].mxu0
  %1131 = vdwg.mxu0
  %v1132 = vmul.f32 %v1089, %v192
  %v1133 = vmul.f32 %v1094, %v193
  %v1134 = vmul.f32 %v1099, %v194
  %v1135 = vmul.f32 %v1104, %v195
  %v1136 = vmul.f32 %v1109, %v196
  %v1137 = vmul.f32 %v1114, %v197
  %v1138 = vmul.f32 %v1119, %v198
  %v1139 = vmul.f32 %v1124, %v199
  %v1140 = vmul.f32 %v1129, %v200
  %v1144 = vrot.slane %v1134, 1
  %v1145 = vrot.slane %v1135, 1
  %v1146 = vsel %vm661, %v1144, %v1145
  %v1147 = vrot.slane %v1136, 1
  %v1148 = vsel %vm661, %v1145, %v1147
  %v1152 = vadd.f32 %v1132, %v1146
  %v1153 = vadd.f32 %v1133, %v1148
  %v1154 = vadd.f32 %v1134, %v1147
  %v1157 = vrot.slane %v1136, 2
  %v1158 = vrot.slane %v1137, 2
  %v1159 = vsel %vm675, %v1157, %v1158
  %v1160 = vrot.slane %v1138, 2
  %v1161 = vsel %vm675, %v1158, %v1160
  %v1165 = vadd.f32 %v1152, %v1159
  %v1166 = vadd.f32 %v1153, %v1161
  %v1167 = vadd.f32 %v1154, %v1160
  %v1170 = vrot.slane %v1138, 3
  %v1171 = vrot.slane %v1139, 3
  %v1172 = vsel %vm689, %v1170, %v1171
  %v1173 = vrot.slane %v1140, 3
  %v1174 = vsel %vm689, %v1171, %v1173
  %v1178 = vadd.f32 %v1165, %v1172
  %v1179 = vadd.f32 %v1166, %v1174
  %v1180 = vadd.f32 %v1167, %v1173
  %v1184 = vrot.slane %v1178, 7
  %v1185 = vrot.slane %v1179, 7
  %v1186 = vsel %vm213, %v1184, %v1185
  %v1187 = vrot.slane %v1180, 7
  %v1188 = vsel %vm213, %v1185, %v1187
  %v1190 = vsel %vm213, %v700, %v1184
  %v1191 = vld [vmem:[%s3] sm:$0xff]
  %v1192 = vld [vmem:[%s3 + $0x8] sm:$0xff]
  %v1193 = vld [vmem:[%s3 + $0x10] sm:$0xff]
  %v1194 = vld [vmem:[%s3 + $0x18] sm:$0xff]
  %v1195 = vld [vmem:[%s4] sm:$0x1]
  %v1197 = vlaneseq
  %v1198 = vshrl.u32 %v1197, 7
  %v1199 = vsub.s32 0, %v1198
  %v1200 = vrot.slane %v1195, %v1199
  %v1203 = vsel %vm50, %v698, 0
  %v1206 = vsel %vm50, %v699, 0
  %v1209 = vsel %vm50, %v1190, 0
  %v1211 = vsel %vm50, %v1186, 0
  %v1213 = vsel %vm50, %v1188, 0
  %v1216 = vsel %vm50, %v1191, 0
  %v1219 = vsel %vm50, %v1192, 0
  %v1222 = vsel %vm50, %v1193, 0
  %v1225 = vsel %vm50, %v1194, 0
  %1227 = vmatprep.subr.mxu0 0.0
  %1228 = vmatpush1.xpose.msra.mxu0 %v1216
  %1229 = vmatprep.subr.mxu0 0.0
  %1230 = vmatpush1.xpose.msra.mxu0 %v1219
  %1231 = vmatprep.subr.mxu0 0.0
  %1232 = vmatpush1.xpose.msra.mxu0 %v1222
  %1233 = vmatprep.subr.mxu0 0.0
  %1234 = vmatpush1.xpose.msra.mxu0 %v1225
  %1235 = vmatprep.subr.mxu0 0.0
  %1236 = vmatpush1.xpose.msra.mxu0 0.0
  %1237 = vmatprep.subr.mxu0 0.0
  %1238 = vmatpush1.xpose.msra.mxu0 0.0
  %1239 = vmatprep.subr.mxu0 0.0
  %1240 = vmatpush1.xpose.msra.mxu0 0.0
  %1241 = vmatprep.subr.mxu0 0.0
  %1242 = vmatpush1.xpose.msra.mxu0 0.0
  %1243 = vmatprep.subr.mxu0 0.0
  %1244 = vmatpush1.xpose.msra.mxu0 0.0
  %1245 = vmatprep.subr.mxu0 0.0
  %1246 = vmatpush1.xpose.msra.mxu0 0.0
  %1247 = vmatprep.subr.mxu0 0.0
  %1248 = vmatpush1.xpose.msra.mxu0 0.0
  %1249 = vmatprep.subr.mxu0 0.0
  %1250 = vmatpush1.xpose.msra.mxu0 0.0
  %1251 = vmatprep.subr.mxu0 0.0
  %1252 = vmatpush1.xpose.msra.mxu0 0.0
  %1253 = vmatprep.subr.mxu0 0.0
  %1254 = vmatpush1.xpose.msra.mxu0 0.0
  %1255 = vmatprep.subr.mxu0 0.0
  %1256 = vmatpush1.xpose.msra.mxu0 0.0
  %1257 = vmatprep.subr.mxu0 0.0
  %1258 = vmatpush1.xpose.msra.mxu0 0.0
  %1259 = vmatprep.subr.mxu0 0.0
  %1260 = vmatpush1.xpose.msra.mxu0 0.0
  %1261 = vmatprep.subr.mxu0 0.0
  %1262 = vmatpush1.xpose.msra.mxu0 0.0
  %1263 = vmatprep.subr.mxu0 0.0
  %1264 = vmatpush1.xpose.msra.mxu0 0.0
  %1265 = vmatprep.subr.mxu0 0.0
  %1266 = vmatpush1.xpose.msra.mxu0 0.0
  %1267 = vmatprep.subr.mxu0 0.0
  %1268 = vmatpush1.xpose.msra.mxu0 0.0
  %1269 = vmatprep.subr.mxu0 0.0
  %1270 = vmatpush1.xpose.msra.mxu0 0.0
  %1271 = vmatprep.subr.mxu0 0.0
  %1272 = vmatpush1.xpose.msra.mxu0 0.0
  %1273 = vmatprep.subr.mxu0 0.0
  %1274 = vmatpush1.xpose.msra.mxu0 0.0
  %1275 = vmatprep.subr.mxu0 0.0
  %1276 = vmatpush1.xpose.msra.mxu0 0.0
  %1277 = vmatprep.subr.mxu0 0.0
  %1278 = vmatpush1.xpose.msra.mxu0 0.0
  %1279 = vmatprep.subr.mxu0 0.0
  %1280 = vmatpush1.xpose.msra.mxu0 0.0
  %1281 = vmatprep.subr.mxu0 0.0
  %1282 = vmatpush1.xpose.msra.mxu0 0.0
  %1283 = vmatprep.subr.mxu0 0.0
  %1284 = vmatpush1.xpose.msra.mxu0 0.0
  %1285 = vmatprep.subr.mxu0 0.0
  %1286 = vmatpush1.xpose.msra.mxu0 0.0
  %1287 = vmatprep.subr.mxu0 0.0
  %1288 = vmatpush1.xpose.msra.mxu0 0.0
  %1289 = vmatprep.subr.mxu0 0.0
  %1290 = vmatpush1.xpose.msra.mxu0 0.0
  %1291 = vmatprep.mubr.f32.mxu0 0.0
  %1292 = vmatmul.mubr.f32.gmra.mrb[0].mxu0 %v1203
  %v1293 = vpop.f32.mrb[0].mxu0
  %v1294 = vadd.f32 %v1200, %v1293
  %v1295 = vpop.f32.mrb[0].mxu0
  %1296 = vmatprep.mubr.f32.mxu0 0.0
  %1297 = vmatmul.mubr.f32.gmra.mrb[0].mxu0 %v1206
  %v1298 = vpop.f32.mrb[0].mxu0
  %v1299 = vadd.f32 %v1200, %v1298
  %v1300 = vpop.f32.mrb[0].mxu0
  %1301 = vmatprep.mubr.f32.mxu0 0.0
  %1302 = vmatmul.mubr.f32.gmra.mrb[0].mxu0 %v1209
  %v1303 = vpop.f32.mrb[0].mxu0
  %v1304 = vadd.f32 %v1200, %v1303
  %v1305 = vpop.f32.mrb[0].mxu0
  %1306 = vmatprep.mubr.f32.mxu0 0.0
  %1307 = vmatmul.mubr.f32.gmra.mrb[0].mxu0 %v1211
  %v1308 = vpop.f32.mrb[0].mxu0
  %v1309 = vadd.f32 %v1200, %v1308
  %v1310 = vpop.f32.mrb[0].mxu0
  %1311 = vmatprep.mubr.f32.mxu0 0.0
  %1312 = vmatmul.mubr.f32.gmra.mrb[0].mxu0 %v1213
  %v1313 = vpop.f32.mrb[0].mxu0
  %v1314 = vadd.f32 %v1200, %v1313
  %v1315 = vpop.f32.mrb[0].mxu0
  %1316 = vdwg.mxu0
  %1317 = vst.msk [vmem:[%s7] sm:$0xff] %vm50, %v1294
  %1318 = vst.msk [vmem:[%s7 + $0x8] sm:$0xff] %vm50, %v1299
  %1319 = vst.msk [vmem:[%s7 + $0x10] sm:$0xff] %vm50, %v1304
  %1320 = vst.msk [vmem:[%s7 + $0x18] sm:$0xff] %vm50, %v1309
  %vm1321 = vcmask 254976
  %1322 = vst.msk [vmem:[%s7 + $0x20] sm:$0x3] %vm1321, %v1314
  // Predicated region
  $region30: #{beit_attention.1} parent=0 // pred_check
    _
  $region31: #{beit_attention.1} parent=0 // pred_check_branch
    %1324 = sbr.rel (0) target = $region33
  $region32: #{beit_attention.1} parent=0 // pred_region
    _
  $region33: #{beit_attention.1} parent=0 // pred_fallthru
    _
  // Predicated region
  $region34: #{beit_attention.1} parent=0 // pred_check
    _
  $region35: #{beit_attention.1} parent=0 // pred_check_branch
    %1326 = sbr.rel (0) target = $region37
  $region36: #{beit_attention.1} parent=0 // pred_region
    _
  $region37: #{beit_attention.1} parent=0 // pred_fallthru
    _

</llo_original>
